<compile_context>
chip_gen: v7x
topology: tpu7x:2x2x1
jax: 0.10.0
libtpu: 0.0.40
codegen_flags: <defaults>
</compile_context>

<pallas_src>
import functools

import jax
import jax.numpy as jnp
from jax.experimental import pallas as pl
from jax.experimental.pallas import tpu as pltpu


def sac_actor_kernel(state_ref,
                     w1_ref, b1_ref,
                     w2_ref, b2_ref,
                     wh_ref, bh_ref,
                     out_ref,
                     *, log_sig_min, log_sig_max, action_size):
    """Fused SACActor forward for one batch tile.

    state_ref : (TB, S)        bf16 (or f32)
    w1_ref    : (S,  H1)       bf16   b1_ref: (1, H1) f32
    w2_ref    : (H1, H2)       bf16   b2_ref: (1, H2) f32
    wh_ref    : (H2, 2*A)      bf16   bh_ref: (1, 2*A) f32  (mean|log_std fused)
    out_ref   : (TB, 2*A)      f32    (mean | clamped log_std)
    """
    cdt = w1_ref.dtype
    x = state_ref[...]

    # layer1 + ReLU  (bf16 MXU, f32 accumulate, f32 elementwise)
    h1 = jnp.dot(x, w1_ref[...], preferred_element_type=jnp.float32)
    h1 = jnp.maximum(h1 + b1_ref[...], 0.0)

    # layer2 + ReLU
    h2 = jnp.dot(h1.astype(cdt), w2_ref[...], preferred_element_type=jnp.float32)
    h2 = jnp.maximum(h2 + b2_ref[...], 0.0)

    # fused heads: one matmul produces [mean | log_std]
    heads = jnp.dot(h2.astype(cdt), wh_ref[...], preferred_element_type=jnp.float32)
    heads = heads + bh_ref[...]

    # clamp only the log_std half (lane mask -> no sub-lane slicing/concat)
    col = jax.lax.broadcasted_iota(jnp.int32, heads.shape, 1)
    clipped = jnp.clip(heads, log_sig_min, log_sig_max)
    out = jnp.where(col >= action_size, clipped, heads)

    out_ref[...] = out.astype(out_ref.dtype)


def _round_up(x, m):
    return ((x + m - 1) // m) * m


def _pad_axis(x, axis, target):
    pad = target - x.shape[axis]
    if pad <= 0:
        return x
    widths = [(0, 0)] * x.ndim
    widths[axis] = (0, pad)
    return jnp.pad(x, widths)


def sac_actor_forward(state, params, log_sig_min=-20.0, log_sig_max=2.0,
                      compute_dtype=jnp.bfloat16, batch_tile=256):
    """Wrapper: fuses heads, pads hidden dims to 128 lanes, grid-tiles batch."""
    B, S = state.shape
    A = params["wm"].shape[1]

    # --- weight layout plumbing (zero padding is numerically exact) ---------
    H1 = _round_up(params["w1"].shape[1], 128)
    H2 = _round_up(params["w2"].shape[1], 128)

    w1 = _pad_axis(params["w1"], 1, H1).astype(compute_dtype)
    b1 = _pad_axis(params["b1"], 1, H1).astype(jnp.float32)
    w2 = _pad_axis(_pad_axis(params["w2"], 0, H1), 1, H2).astype(compute_dtype)
    b2 = _pad_axis(params["b2"], 1, H2).astype(jnp.float32)
    wh = _pad_axis(jnp.concatenate([params["wm"], params["ws"]], axis=1),
                   0, H2).astype(compute_dtype)
    bh = jnp.concatenate([params["bm"], params["bs"]], axis=1).astype(jnp.float32)

    # --- batch tiling -------------------------------------------------------
    TB = min(_round_up(batch_tile, 8), _round_up(B, 8))
    B_pad = pl.cdiv(B, TB) * TB
    x = _pad_axis(state, 0, B_pad).astype(compute_dtype)

    kernel = functools.partial(
        sac_actor_kernel,
        log_sig_min=float(log_sig_min),
        log_sig_max=float(log_sig_max),
        action_size=A)

    out = pl.pallas_call(
        kernel,
        out_shape=jax.ShapeDtypeStruct((B_pad, 2 * A), jnp.float32),
        grid=(B_pad // TB,),
        in_specs=[
            pl.BlockSpec((TB, S), lambda i: (i, 0)),       # batched state tile
            pl.BlockSpec(w1.shape, lambda i: (0, 0)),      # weights stay resident
            pl.BlockSpec(b1.shape, lambda i: (0, 0)),
            pl.BlockSpec(w2.shape, lambda i: (0, 0)),
            pl.BlockSpec(b2.shape, lambda i: (0, 0)),
            pl.BlockSpec(wh.shape, lambda i: (0, 0)),
            pl.BlockSpec(bh.shape, lambda i: (0, 0)),
        ],
        out_specs=pl.BlockSpec((TB, 2 * A), lambda i: (i, 0)),
        compiler_params=pltpu.CompilerParams(
            dimension_semantics=("parallel",)),
    )(x, w1, b1, w2, b2, wh, bh)

    mean = out[:B, :A]
    log_std = out[:B, A:]
    return mean, log_std


def init_params(key, state_size, action_size, fc_1=64, fc_2=64):
    """PyTorch nn.Linear-style init (U[-1/sqrt(fan_in), 1/sqrt(fan_in)]).
    Weights stored as [in_features, out_features]."""
    def linear(key, fan_in, fan_out):
        kw, kb = jax.random.split(key)
        bound = 1.0 / jnp.sqrt(fan_in)
        w = jax.random.uniform(kw, (fan_in, fan_out), jnp.float32, -bound, bound)
        b = jax.random.uniform(kb, (1, fan_out), jnp.float32, -bound, bound)
        return w, b

    k1, k2, k3, k4 = jax.random.split(key, 4)
    w1, b1 = linear(k1, state_size, fc_1)
    w2, b2 = linear(k2, fc_1, fc_2)
    wm, bm = linear(k3, fc_2, action_size)
    ws, bs = linear(k4, fc_2, action_size)
    return dict(w1=w1, b1=b1, w2=w2, b2=b2, wm=wm, bm=bm, ws=ws, bs=bs)


def reference_forward(state, params, log_sig_min=-20.0, log_sig_max=2.0,
                      compute_dtype=jnp.float32):
    """Pure-JAX reference. `compute_dtype` lets us match the kernel's bf16
    MXU-operand / f32-accumulate scheme for tight comparison."""
    def dot(a, b):
        return jnp.dot(a.astype(compute_dtype), b.astype(compute_dtype),
                       preferred_element_type=jnp.float32)

    h1 = jnp.maximum(dot(state, params["w1"]) + params["b1"], 0.0)
    h2 = jnp.maximum(dot(h1, params["w2"]) + params["b2"], 0.0)
    mean = dot(h2, params["wm"]) + params["bm"]
    log_std = jnp.clip(dot(h2, params["ws"]) + params["bs"],
                       log_sig_min, log_sig_max)
    return mean, log_std


if __name__ == "__main__":
    # TODO(synk): only forward() is kernelized; sample() (Normal.rsample, tanh
    # squashing, log_prob correction) is left to plain JAX if needed.
    state_size, action_size, batch = 8, 4, 2

    key = jax.random.PRNGKey(0)
    k_params, k_state, k_big = jax.random.split(key, 3)
    params = init_params(k_params, state_size, action_size)
    state = jax.random.normal(k_state, (batch, state_size), dtype=jnp.float32)

    # --- small batch (single grid step) ------------------------------------
    mean, log_std = sac_actor_forward(state, params)
    jax.block_until_ready((mean, log_std))

    # tight check vs. a reference that uses the same bf16-operand dots
    ref_mean_bf, ref_ls_bf = reference_forward(
        state, params, compute_dtype=jnp.bfloat16)
    assert jnp.allclose(mean, ref_mean_bf, atol=1e-3, rtol=1e-3)
    assert jnp.allclose(log_std, ref_ls_bf, atol=1e-3, rtol=1e-3)

    # loose check vs. a pure-f32 reference (bf16 MXU operands -> ~0.5% error)
    ref_mean, ref_log_std = reference_forward(state, params)
    assert jnp.allclose(mean, ref_mean, atol=5e-2, rtol=5e-2)
    assert jnp.allclose(log_std, ref_log_std, atol=5e-2, rtol=5e-2)
    assert mean.shape == (batch, action_size)
    assert log_std.shape == (batch, action_size)

    # --- larger batch (exercises multi-step grid + pipelining) -------------
    big_state = jax.random.normal(k_big, (512, state_size), dtype=jnp.float32)
    big_mean, big_log_std = sac_actor_forward(big_state, params, batch_tile=256)
    jax.block_until_ready((big_mean, big_log_std))

    big_ref_mean, big_ref_ls = reference_forward(
        big_state, params, compute_dtype=jnp.bfloat16)
    assert jnp.allclose(big_mean, big_ref_mean, atol=1e-3, rtol=1e-3)
    assert jnp.allclose(big_log_std, big_ref_ls, atol=1e-3, rtol=1e-3)
    assert big_mean.shape == (512, action_size)

    print("KERNEL_OK")
</pallas_src>

<mosaic_0001>
module attributes {stable_mosaic.version = 11 : i64} {
  func.func @sac_actor_kernel(%arg0: i32, %arg1: memref<8x8xbf16, #tpu.memory_space<vmem>>, %arg2: memref<8x128xbf16, #tpu.memory_space<vmem>>, %arg3: memref<1x128xf32, #tpu.memory_space<vmem>>, %arg4: memref<128x128xbf16, #tpu.memory_space<vmem>>, %arg5: memref<1x128xf32, #tpu.memory_space<vmem>>, %arg6: memref<128x8xbf16, #tpu.memory_space<vmem>>, %arg7: memref<1x8xf32, #tpu.memory_space<vmem>>, %arg8: memref<8x8xf32, #tpu.memory_space<vmem>>) attributes {dimension_semantics = [#tpu.dimension_semantics<parallel>], iteration_bounds = array<i64: 1>, scalar_prefetch = 0 : i64, scratch_operands = 0 : i64, tpu.core_type = #tpu.core_type<tc>, window_params = [{transform_indices = @transform_0, window_bounds = array<i64: 8, 8>}, {pipeline_mode = #tpu.pipeline_mode<synchronous>, transform_indices = @transform_1, window_bounds = array<i64: 8, 128>}, {pipeline_mode = #tpu.pipeline_mode<synchronous>, transform_indices = @transform_2, window_bounds = array<i64: 1, 128>}, {pipeline_mode = #tpu.pipeline_mode<synchronous>, transform_indices = @transform_3, window_bounds = array<i64: 128, 128>}, {pipeline_mode = #tpu.pipeline_mode<synchronous>, transform_indices = @transform_4, window_bounds = array<i64: 1, 128>}, {pipeline_mode = #tpu.pipeline_mode<synchronous>, transform_indices = @transform_5, window_bounds = array<i64: 128, 8>}, {pipeline_mode = #tpu.pipeline_mode<synchronous>, transform_indices = @transform_6, window_bounds = array<i64: 1, 8>}, {transform_indices = @transform_7, window_bounds = array<i64: 8, 8>}]} {
    %c0 = arith.constant 0 : index
    %c0_0 = arith.constant 0 : index
    %0 = vector.load %arg1[%c0, %c0_0] : memref<8x8xbf16, #tpu.memory_space<vmem>>, vector<8x8xbf16>
    %c0_1 = arith.constant 0 : index
    %c0_2 = arith.constant 0 : index
    %1 = vector.load %arg2[%c0_1, %c0_2] : memref<8x128xbf16, #tpu.memory_space<vmem>>, vector<8x128xbf16>
    %cst = arith.constant dense<0.000000e+00> : vector<8x128xf32>
    %2 = tpu.matmul %0, %1, %cst {dimension_numbers = #tpu.dot_dimension_numbers<[1], [0], [0], [1], [0, 0, 1, 1], [], []>} : vector<8x8xbf16>, vector<8x128xbf16>, vector<8x128xf32> -> vector<8x128xf32>
    %c0_3 = arith.constant 0 : index
    %c0_4 = arith.constant 0 : index
    %3 = vector.load %arg3[%c0_3, %c0_4] : memref<1x128xf32, #tpu.memory_space<vmem>>, vector<1x128xf32>
    %4 = vector.broadcast %3 : vector<1x128xf32> to vector<8x128xf32>
    %5 = arith.addf %2, %4 : vector<8x128xf32>
    %cst_5 = arith.constant 0.000000e+00 : f32
    %6 = vector.broadcast %cst_5 : f32 to vector<8x128xf32>
    %7 = arith.maximumf %5, %6 : vector<8x128xf32>
    %8 = arith.truncf %7 : vector<8x128xf32> to vector<8x128xbf16>
    %c0_6 = arith.constant 0 : index
    %c0_7 = arith.constant 0 : index
    %9 = vector.load %arg4[%c0_6, %c0_7] : memref<128x128xbf16, #tpu.memory_space<vmem>>, vector<128x128xbf16>
    %cst_8 = arith.constant dense<0.000000e+00> : vector<8x128xf32>
    %10 = tpu.matmul %8, %9, %cst_8 {dimension_numbers = #tpu.dot_dimension_numbers<[1], [0], [0], [1], [0, 0, 1, 1], [], []>} : vector<8x128xbf16>, vector<128x128xbf16>, vector<8x128xf32> -> vector<8x128xf32>
    %c0_9 = arith.constant 0 : index
    %c0_10 = arith.constant 0 : index
    %11 = vector.load %arg5[%c0_9, %c0_10] : memref<1x128xf32, #tpu.memory_space<vmem>>, vector<1x128xf32>
    %12 = vector.broadcast %11 : vector<1x128xf32> to vector<8x128xf32>
    %13 = arith.addf %10, %12 : vector<8x128xf32>
    %cst_11 = arith.constant 0.000000e+00 : f32
    %14 = vector.broadcast %cst_11 : f32 to vector<8x128xf32>
    %15 = arith.maximumf %13, %14 : vector<8x128xf32>
    %16 = arith.truncf %15 : vector<8x128xf32> to vector<8x128xbf16>
    %c0_12 = arith.constant 0 : index
    %c0_13 = arith.constant 0 : index
    %17 = vector.load %arg6[%c0_12, %c0_13] : memref<128x8xbf16, #tpu.memory_space<vmem>>, vector<128x8xbf16>
    %cst_14 = arith.constant dense<0.000000e+00> : vector<8x8xf32>
    %18 = tpu.matmul %16, %17, %cst_14 {dimension_numbers = #tpu.dot_dimension_numbers<[1], [0], [0], [1], [0, 0, 1, 1], [], []>} : vector<8x128xbf16>, vector<128x8xbf16>, vector<8x8xf32> -> vector<8x8xf32>
    %c0_15 = arith.constant 0 : index
    %c0_16 = arith.constant 0 : index
    %19 = vector.load %arg7[%c0_15, %c0_16] : memref<1x8xf32, #tpu.memory_space<vmem>>, vector<1x8xf32>
    %20 = vector.broadcast %19 : vector<1x8xf32> to vector<8x8xf32>
    %21 = arith.addf %18, %20 : vector<8x8xf32>
    %22 = tpu.iota {dimensions = array<i32: 1>} : vector<8x8xi32>
    %cst_17 = arith.constant -2.000000e+01 : f32
    %cst_18 = arith.constant 2.000000e+00 : f32
    %23 = vector.broadcast %cst_17 : f32 to vector<8x8xf32>
    %24 = arith.maximumf %23, %21 : vector<8x8xf32>
    %25 = vector.broadcast %cst_18 : f32 to vector<8x8xf32>
    %26 = arith.minimumf %25, %24 : vector<8x8xf32>
    %c4_i32 = arith.constant 4 : i32
    %27 = vector.broadcast %c4_i32 : i32 to vector<8x8xi32>
    %28 = arith.cmpi sge, %22, %27 : vector<8x8xi32>
    %29 = arith.select %28, %26, %21 : vector<8x8xi1>, vector<8x8xf32>
    %c0_19 = arith.constant 0 : index
    %c0_20 = arith.constant 0 : index
    %30 = vector.load %arg8[%c0_19, %c0_20] : memref<8x8xf32, #tpu.memory_space<vmem>>, vector<8x8xf32>
    tpu.vector_store %arg8[%c0_19, %c0_20], %29 {strides = array<i32>} : memref<8x8xf32, #tpu.memory_space<vmem>>, vector<8x8xf32>,
    return
  }
  func.func @transform_0(%arg0: i32) -> (i32, i32) {
    %c0_i32 = arith.constant 0 : i32
    %c0_i32_0 = arith.constant 0 : i32
    return %arg0, %c0_i32 : i32, i32
  }
  func.func @transform_1(%arg0: i32) -> (i32, i32) {
    %c0_i32 = arith.constant 0 : i32
    %c0_i32_0 = arith.constant 0 : i32
    %c0_i32_1 = arith.constant 0 : i32
    return %c0_i32, %c0_i32_0 : i32, i32
  }
  func.func @transform_2(%arg0: i32) -> (i32, i32) {
    %c0_i32 = arith.constant 0 : i32
    %c0_i32_0 = arith.constant 0 : i32
    %c0_i32_1 = arith.constant 0 : i32
    return %c0_i32, %c0_i32_0 : i32, i32
  }
  func.func @transform_3(%arg0: i32) -> (i32, i32) {
    %c0_i32 = arith.constant 0 : i32
    %c0_i32_0 = arith.constant 0 : i32
    %c0_i32_1 = arith.constant 0 : i32
    return %c0_i32, %c0_i32_0 : i32, i32
  }
  func.func @transform_4(%arg0: i32) -> (i32, i32) {
    %c0_i32 = arith.constant 0 : i32
    %c0_i32_0 = arith.constant 0 : i32
    %c0_i32_1 = arith.constant 0 : i32
    return %c0_i32, %c0_i32_0 : i32, i32
  }
  func.func @transform_5(%arg0: i32) -> (i32, i32) {
    %c0_i32 = arith.constant 0 : i32
    %c0_i32_0 = arith.constant 0 : i32
    %c0_i32_1 = arith.constant 0 : i32
    return %c0_i32, %c0_i32_0 : i32, i32
  }
  func.func @transform_6(%arg0: i32) -> (i32, i32) {
    %c0_i32 = arith.constant 0 : i32
    %c0_i32_0 = arith.constant 0 : i32
    %c0_i32_1 = arith.constant 0 : i32
    return %c0_i32, %c0_i32_0 : i32, i32
  }
  func.func @transform_7(%arg0: i32) -> (i32, i32) {
    %c0_i32 = arith.constant 0 : i32
    %c0_i32_0 = arith.constant 0 : i32
    return %arg0, %c0_i32 : i32, i32
  }
}

</mosaic_0001>

<llo_original>
// kernel: tpu_custom_call.1
$region0: #{tpu_custom_call.1}
  #allocation0 [shape = 'u32[]', space=smem, size = 0x4, offset = 0x4, fixed_abs, tag = 'smem constant byte address 0x4 - core index']
  #allocation1 [shape = 'u32[144,128]{1,0:T(1,128)}', space=vmem, size = 0x12000, scoped, tag = 'internal scratch']
  %s0 = inlined_call_operand.vmem [shape: bf16[8,8], index: 0, kind: input, shape index: {}]
  %s1 = inlined_call_operand.vmem [shape: bf16[8,128], index: 1, kind: input, shape index: {}]
  %s2 = inlined_call_operand.vmem [shape: f32[1,128], index: 2, kind: input, shape index: {}]
  %s3 = inlined_call_operand.vmem [shape: bf16[128,128], index: 3, kind: input, shape index: {}]
  %s4 = inlined_call_operand.vmem [shape: f32[1,128], index: 4, kind: input, shape index: {}]
  %s5 = inlined_call_operand.vmem [shape: bf16[128,8], index: 5, kind: input, shape index: {}]
  %s6 = inlined_call_operand.vmem [shape: f32[1,8], index: 6, kind: input, shape index: {}]
  %s7 = inlined_call_operand.hbm [shape: f32[8,8], index: 7, kind: output, shape index: {}]
  %s8 = sld [smem:[#allocation0]]
  $region38: #{tpu_custom_call.1} parent=0
    _
  %s10 = ssub.s32 1, %s8
  %s11 = scalar_select 0, %s10, %s8
  $region1: #{tpu_custom_call.1} parent=0
    #allocation2 [shape = 'u8[4096]{0}', space=vmem, size = 0x1000, scoped, tag = 'output window, operand 0, single buffered']
    #allocation3 [shape = 's32[1]{0}', space=sflag, size = 0x4, scoped, tag = 'scoped memory for tpu_custom_call.1']
    %12 = vsyncpa [#allocation3], 0
    // Predicated region
    $region2: #{tpu_custom_call.1} parent=1 // pred_check
      _
    $region3: #{tpu_custom_call.1} parent=1 // pred_check_branch
      %14 = sbr.rel (0) target = $region5
    $region4: #{tpu_custom_call.1} parent=1 // pred_region
      _
    $region5: #{tpu_custom_call.1} parent=1 // pred_fallthru
      _
    // Predicated region
    $region6: #{tpu_custom_call.1} parent=1 // pred_check
      _
    $region7: #{tpu_custom_call.1} parent=1 // pred_check_branch
      %16 = sbr.rel (0) target = $region9
    $region8: #{tpu_custom_call.1} parent=1 // pred_region
      _
    $region9: #{tpu_custom_call.1} parent=1 // pred_fallthru
      _
    // Predicated region
    $region10: #{tpu_custom_call.1} parent=1 // pred_check
      _
    $region11: #{tpu_custom_call.1} parent=1 // pred_check_branch
      %18 = sbr.rel (0) target = $region13
    $region12: #{tpu_custom_call.1} parent=1 // pred_region
      _
    $region13: #{tpu_custom_call.1} parent=1 // pred_fallthru
      _
    // Predicated region
    $region14: #{tpu_custom_call.1} parent=1 // pred_check
      _
    $region15: #{tpu_custom_call.1} parent=1 // pred_check_branch
      %20 = sbr.rel (0) target = $region17
    $region16: #{tpu_custom_call.1} parent=1 // pred_region
      _
    $region17: #{tpu_custom_call.1} parent=1 // pred_fallthru
      _
    // Predicated region
    $region18: #{tpu_custom_call.1} parent=1 // pred_check
      _
    $region19: #{tpu_custom_call.1} parent=1 // pred_check_branch
      %22 = sbr.rel (0) target = $region21
    $region20: #{tpu_custom_call.1} parent=1 // pred_region
      _
    $region21: #{tpu_custom_call.1} parent=1 // pred_fallthru
      _
    // Predicated region
    $region22: #{tpu_custom_call.1} parent=1 // pred_check
      _
    $region23: #{tpu_custom_call.1} parent=1 // pred_check_branch
      %24 = sbr.rel (0) target = $region25
    $region24: #{tpu_custom_call.1} parent=1 // pred_region
      _
    $region25: #{tpu_custom_call.1} parent=1 // pred_fallthru
      _
    // Predicated region
    $region26: #{tpu_custom_call.1} parent=1 // pred_check
      _
    $region27: #{tpu_custom_call.1} parent=1 // pred_check_branch
      %26 = sbr.rel (0) target = $region29
    $region28: #{tpu_custom_call.1} parent=1 // pred_region
      _
    $region29: #{tpu_custom_call.1} parent=1 // pred_fallthru
      _
    %v28 = vld [vmem:[%s0] sm:$0xf]
    %v29 = vld [vmem:[%s1] sm:$0xf]
    %v30 = vld [vmem:[%s2] sm:$0x1]
    %v32 = vlaneseq
    %v33 = vshrl.u32 %v32, 7
    %v34 = vsub.s32 0, %v33
    %v35 = vrot.slane %v30, %v34
    %vm37 = vcmask 64512
    %v39 = vsel %vm37, %v28, 0
    %vm41 = vcmask 1043456
    %v43 = vsel %vm41, %v29, 0
    %45 = vmatprep.subr.bf16.mxu0 0
    %46 = vmatpush1.bf16.msra.mxu0 %v43
    %47 = vmatprep.subr.bf16.mxu0 0
    %48 = vmatpush1.bf16.msra.mxu0 0
    %49 = vmatprep.subr.bf16.mxu0 0
    %50 = vmatpush1.bf16.msra.mxu0 0
    %51 = vmatprep.subr.bf16.mxu0 0
    %52 = vmatpush1.bf16.msra.mxu0 0
    %53 = vmatprep.subr.bf16.mxu0 0
    %54 = vmatpush1.bf16.msra.mxu0 0
    %55 = vmatprep.subr.bf16.mxu0 0
    %56 = vmatpush1.bf16.msra.mxu0 0
    %57 = vmatprep.subr.bf16.mxu0 0
    %58 = vmatpush1.bf16.msra.mxu0 0
    %59 = vmatprep.subr.bf16.mxu0 0
    %60 = vmatpush1.bf16.msra.mxu0 0
    %61 = vmatprep.subr.bf16.mxu0 0
    %62 = vmatpush1.bf16.msra.mxu0 0
    %63 = vmatprep.subr.bf16.mxu0 0
    %64 = vmatpush1.bf16.msra.mxu0 0
    %65 = vmatprep.subr.bf16.mxu0 0
    %66 = vmatpush1.bf16.msra.mxu0 0
    %67 = vmatprep.subr.bf16.mxu0 0
    %68 = vmatpush1.bf16.msra.mxu0 0
    %69 = vmatprep.subr.bf16.mxu0 0
    %70 = vmatpush1.bf16.msra.mxu0 0
    %71 = vmatprep.subr.bf16.mxu0 0
    %72 = vmatpush1.bf16.msra.mxu0 0
    %73 = vmatprep.subr.bf16.mxu0 0
    %74 = vmatpush1.bf16.msra.mxu0 0
    %75 = vmatprep.subr.bf16.mxu0 0
    %76 = vmatpush1.bf16.msra.mxu0 0
    %77 = vmatprep.mubr.bf16.mxu0 0
    %78 = vmatmul.mubr.bf16.gmra.mrb[0].mxu0 %v39
    %v79 = vpop.f32.mrb[0].mxu0
    %v80 = vadd.f32 %v35, %v79
    %v81 = vpop.f32.mrb[0].mxu0
    %v82 = vpop.f32.mrb[0].mxu0
    %v83 = vpop.f32.mrb[0].mxu0
    %84 = vdwg.mxu0
    %v85 = vmax.f32 %v80, 0.0
    %v86 = vpack.c.bf16 %v85, %v85
    %v87 = vld [vmem:[%s3] sm:$0xf]
    %v88 = vld [vmem:[%s3 + $0x4] sm:$0xf]
    %v89 = vld [vmem:[%s3 + $0x8] sm:$0xf]
    %v90 = vld [vmem:[%s3 + $0xc] sm:$0xf]
    %v91 = vld [vmem:[%s3 + $0x10] sm:$0xf]
    %v92 = vld [vmem:[%s3 + $0x14] sm:$0xf]
    %v93 = vld [vmem:[%s3 + $0x18] sm:$0xf]
    %v94 = vld [vmem:[%s3 + $0x1c] sm:$0xf]
    %v95 = vld [vmem:[%s3 + $0x20] sm:$0xf]
    %v96 = vld [vmem:[%s3 + $0x24] sm:$0xf]
    %v97 = vld [vmem:[%s3 + $0x28] sm:$0xf]
    %v98 = vld [vmem:[%s3 + $0x2c] sm:$0xf]
    %v99 = vld [vmem:[%s3 + $0x30] sm:$0xf]
    %v100 = vld [vmem:[%s3 + $0x34] sm:$0xf]
    %v101 = vld [vmem:[%s3 + $0x38] sm:$0xf]
    %v102 = vld [vmem:[%s3 + $0x3c] sm:$0xf]
    %v103 = vld [vmem:[%s4] sm:$0x1]
    %v105 = vlaneseq
    %v106 = vshrl.u32 %v105, 7
    %v107 = vsub.s32 0, %v106
    %v108 = vrot.slane %v103, %v107
    %v126 = vunpack.c.l.b16 %v87
    %v127 = vunpack.c.l.b16 %v88
    %v128 = vunpack.c.l.b16 %v89
    %v129 = vunpack.c.l.b16 %v90
    %v130 = vunpack.c.l.b16 %v91
    %v131 = vunpack.c.l.b16 %v92
    %v132 = vunpack.c.l.b16 %v93
    %v133 = vunpack.c.l.b16 %v94
    %v134 = vunpack.c.l.b16 %v95
    %v135 = vunpack.c.l.b16 %v96
    %v136 = vunpack.c.l.b16 %v97
    %v137 = vunpack.c.l.b16 %v98
    %v138 = vunpack.c.l.b16 %v99
    %v139 = vunpack.c.l.b16 %v100
    %v140 = vunpack.c.l.b16 %v101
    %v141 = vunpack.c.l.b16 %v102
    %v142 = vpack.c.b16 %v127, %v126
    %v143 = vpack.c.b16 %v129, %v128
    %v144 = vpack.c.b16 %v131, %v130
    %v145 = vpack.c.b16 %v133, %v132
    %v146 = vpack.c.b16 %v135, %v134
    %v147 = vpack.c.b16 %v137, %v136
    %v148 = vpack.c.b16 %v139, %v138
    %v149 = vpack.c.b16 %v141, %v140
    %158 = vmatprep.subr.bf16.mxu0 0
    %159 = vmatpush1.bf16.msra.mxu0 %v142
    %160 = vmatprep.subr.bf16.mxu0 0
    %161 = vmatpush1.bf16.msra.mxu0 %v143
    %162 = vmatprep.subr.bf16.mxu0 0
    %163 = vmatpush1.bf16.msra.mxu0 %v144
    %164 = vmatprep.subr.bf16.mxu0 0
    %165 = vmatpush1.bf16.msra.mxu0 %v145
    %166 = vmatprep.subr.bf16.mxu0 0
    %167 = vmatpush1.bf16.msra.mxu0 %v146
    %168 = vmatprep.subr.bf16.mxu0 0
    %169 = vmatpush1.bf16.msra.mxu0 %v147
    %170 = vmatprep.subr.bf16.mxu0 0
    %171 = vmatpush1.bf16.msra.mxu0 %v148
    %172 = vmatprep.subr.bf16.mxu0 0
    %173 = vmatpush1.bf16.msra.mxu0 %v149
    %174 = vmatprep.subr.bf16.mxu0 0
    %175 = vmatpush1.bf16.msra.mxu0 0
    %176 = vmatprep.subr.bf16.mxu0 0
    %177 = vmatpush1.bf16.msra.mxu0 0
    %178 = vmatprep.subr.bf16.mxu0 0
    %179 = vmatpush1.bf16.msra.mxu0 0
    %180 = vmatprep.subr.bf16.mxu0 0
    %181 = vmatpush1.bf16.msra.mxu0 0
    %182 = vmatprep.subr.bf16.mxu0 0
    %183 = vmatpush1.bf16.msra.mxu0 0
    %184 = vmatprep.subr.bf16.mxu0 0
    %185 = vmatpush1.bf16.msra.mxu0 0
    %186 = vmatprep.subr.bf16.mxu0 0
    %187 = vmatpush1.bf16.msra.mxu0 0
    %188 = vmatprep.subr.bf16.mxu0 0
    %189 = vmatpush1.bf16.msra.mxu0 0
    %190 = vmatprep.mubr.bf16.mxu0 0
    %191 = vmatmul.mubr.bf16.gmra.mrb[0].mxu0 %v86
    %v192 = vpop.f32.mrb[0].mxu0
    %v193 = vadd.f32 %v108, %v192
    %v194 = vpop.f32.mrb[0].mxu0
    %v195 = vpop.f32.mrb[0].mxu0
    %v196 = vpop.f32.mrb[0].mxu0
    %197 = vdwg.mxu0
    %v198 = vmax.f32 %v193, 0.0
    %v199 = vpack.c.bf16 %v198, %v198
    %v200 = vld [vmem:[%s5] sm:$0xf]
    %v201 = vld [vmem:[%s5 + $0x4] sm:$0xf]
    %v202 = vld [vmem:[%s5 + $0x8] sm:$0xf]
    %v203 = vld [vmem:[%s5 + $0xc] sm:$0xf]
    %v204 = vld [vmem:[%s5 + $0x10] sm:$0xf]
    %v205 = vld [vmem:[%s5 + $0x14] sm:$0xf]
    %v206 = vld [vmem:[%s5 + $0x18] sm:$0xf]
    %v207 = vld [vmem:[%s5 + $0x1c] sm:$0xf]
    %v208 = vld [vmem:[%s5 + $0x20] sm:$0xf]
    %v209 = vld [vmem:[%s5 + $0x24] sm:$0xf]
    %v210 = vld [vmem:[%s5 + $0x28] sm:$0xf]
    %v211 = vld [vmem:[%s5 + $0x2c] sm:$0xf]
    %v212 = vld [vmem:[%s5 + $0x30] sm:$0xf]
    %v213 = vld [vmem:[%s5 + $0x34] sm:$0xf]
    %v214 = vld [vmem:[%s5 + $0x38] sm:$0xf]
    %v215 = vld [vmem:[%s5 + $0x3c] sm:$0xf]
    %v216 = vld [vmem:[%s6] sm:$0x1]
    %v218 = vlaneseq
    %v219 = vshrl.u32 %v218, 7
    %v220 = vsub.s32 0, %v219
    %v221 = vrot.slane %v216, %v220
    %v239 = vunpack.c.l.b16 %v200
    %v240 = vunpack.c.l.b16 %v201
    %v241 = vunpack.c.l.b16 %v202
    %v242 = vunpack.c.l.b16 %v203
    %v243 = vunpack.c.l.b16 %v204
    %v244 = vunpack.c.l.b16 %v205
    %v245 = vunpack.c.l.b16 %v206
    %v246 = vunpack.c.l.b16 %v207
    %v247 = vunpack.c.l.b16 %v208
    %v248 = vunpack.c.l.b16 %v209
    %v249 = vunpack.c.l.b16 %v210
    %v250 = vunpack.c.l.b16 %v211
    %v251 = vunpack.c.l.b16 %v212
    %v252 = vunpack.c.l.b16 %v213
    %v253 = vunpack.c.l.b16 %v214
    %v254 = vunpack.c.l.b16 %v215
    %v255 = vpack.c.b16 %v240, %v239
    %v256 = vpack.c.b16 %v242, %v241
    %v257 = vpack.c.b16 %v244, %v243
    %v258 = vpack.c.b16 %v246, %v245
    %v259 = vpack.c.b16 %v248, %v247
    %v260 = vpack.c.b16 %v250, %v249
    %v261 = vpack.c.b16 %v252, %v251
    %v262 = vpack.c.b16 %v254, %v253
    %271 = vmatprep.subr.bf16.mxu0 0
    %272 = vmatpush1.bf16.msra.mxu0 %v255
    %273 = vmatprep.subr.bf16.mxu0 0
    %274 = vmatpush1.bf16.msra.mxu0 %v256
    %275 = vmatprep.subr.bf16.mxu0 0
    %276 = vmatpush1.bf16.msra.mxu0 %v257
    %277 = vmatprep.subr.bf16.mxu0 0
    %278 = vmatpush1.bf16.msra.mxu0 %v258
    %279 = vmatprep.subr.bf16.mxu0 0
    %280 = vmatpush1.bf16.msra.mxu0 %v259
    %281 = vmatprep.subr.bf16.mxu0 0
    %282 = vmatpush1.bf16.msra.mxu0 %v260
    %283 = vmatprep.subr.bf16.mxu0 0
    %284 = vmatpush1.bf16.msra.mxu0 %v261
    %285 = vmatprep.subr.bf16.mxu0 0
    %286 = vmatpush1.bf16.msra.mxu0 %v262
    %287 = vmatprep.subr.bf16.mxu0 0
    %288 = vmatpush1.bf16.msra.mxu0 0
    %289 = vmatprep.subr.bf16.mxu0 0
    %290 = vmatpush1.bf16.msra.mxu0 0
    %291 = vmatprep.subr.bf16.mxu0 0
    %292 = vmatpush1.bf16.msra.mxu0 0
    %293 = vmatprep.subr.bf16.mxu0 0
    %294 = vmatpush1.bf16.msra.mxu0 0
    %295 = vmatprep.subr.bf16.mxu0 0
    %296 = vmatpush1.bf16.msra.mxu0 0
    %297 = vmatprep.subr.bf16.mxu0 0
    %298 = vmatpush1.bf16.msra.mxu0 0
    %299 = vmatprep.subr.bf16.mxu0 0
    %300 = vmatpush1.bf16.msra.mxu0 0
    %301 = vmatprep.subr.bf16.mxu0 0
    %302 = vmatpush1.bf16.msra.mxu0 0
    %303 = vmatprep.mubr.bf16.mxu0 0
    %304 = vmatmul.mubr.bf16.gmra.mrb[0].mxu0 %v199
    %v305 = vpop.f32.mrb[0].mxu0
    %v306 = vadd.f32 %v221, %v305
    %v307 = vpop.f32.mrb[0].mxu0
    %v308 = vpop.f32.mrb[0].mxu0
    %v309 = vpop.f32.mrb[0].mxu0
    %310 = vdwg.mxu0
    %v311 = vlaneseq
    %v312 = vand.u32 %v311, 127
    %v313 = vmax.f32 %v306, -20.0
    %v314 = vmin.f32 %v313, 2.0
    %vm315 = vcmp.ge.s32.totalorder %v312, 4
    %v316 = vsel %vm315, %v314, %v306
    %317 = vst.msk [vmem:[#allocation2] sm:$0xff] %vm37, %v316
    // Predicated region
    $region30: #{tpu_custom_call.1} parent=1 // pred_check
      _
    $region31: #{tpu_custom_call.1} parent=1 // pred_check_branch
      %319 = sbr.rel (0) target = $region33
    $region32: #{tpu_custom_call.1} parent=1 // pred_region
      %s321 = ssub.s32 128, 128
      %322 = vsyncadd [#allocation3], %s321
      %s324 = sshll.u32 [#allocation2], 4
      %s325 = int_to_ptr.vmem [resolvable:$true] %s324
      %327 = dma.vmem_to_hbm [thread:$0]  %s325, 128, %s7, [#allocation3]
    $region33: #{tpu_custom_call.1} parent=1 // pred_fallthru
      _
    // Predicated region
    $region34: #{tpu_custom_call.1} parent=1 // pred_check
      _
    $region35: #{tpu_custom_call.1} parent=1 // pred_check_branch
      %329 = sbr.rel (0) target = $region37
    $region36: #{tpu_custom_call.1} parent=1 // pred_region
      %330 = dma.done [#allocation3], 128
    $region37: #{tpu_custom_call.1} parent=1 // pred_fallthru
      _
    %331 = vsyncpa [#allocation3], 1

</llo_original>
